<compile_context>
chip_gen: v7x
topology: tpu7x:2x2x1
jax: 0.10.0
libtpu: 0.0.40
codegen_flags: <defaults>
</compile_context>

<pallas_src>
import functools

import jax
import jax.numpy as jnp
from jax.experimental import pallas as pl
from jax.experimental.pallas import tpu as pltpu


def _conv_bn_silu_kernel(a_ref, w_ref, scale_ref, bias_ref, o_ref, acc_ref):
    """One (tm, tn) output tile: acc += a @ w over K; epilogue = BN + SiLU."""
    k = pl.program_id(2)

    @pl.when(k == 0)
    def _():
        acc_ref[...] = jnp.zeros_like(acc_ref)

    acc_ref[...] += jnp.dot(a_ref[...], w_ref[...],
                            preferred_element_type=jnp.float32)

    @pl.when(k == pl.num_programs(2) - 1)
    def _():
        # Folded BatchNorm (per output channel) fused with SiLU = y*sigmoid(y).
        y = acc_ref[...] * scale_ref[...] + bias_ref[...]
        o_ref[...] = (y * jax.nn.sigmoid(y)).astype(o_ref.dtype)


def conv_bn_silu(x, w, conv_bias, gamma, beta, running_mean, running_var,
                 *, stride=1, eps=1e-3, tm_target=256, tn_target=256):
    """BaseConv.forward (inference): SiLU(BN(Conv2d(x))), NCHW in / NCHW out.

    Conv2d uses 'same'-style padding pad=(k-1)//2, groups=1, bias optional.
    BN uses running statistics (eval mode), folded into scale/bias.
    """
    B, C_in, H, W = x.shape
    C_out, C_in_w, KH, KW = w.shape
    assert C_in == C_in_w, "groups != 1 is not supported"
    # TODO(synk): grouped / depthwise convolution (groups > 1) not implemented.
    # TODO(synk): training-mode BatchNorm (batch statistics) not implemented;
    #             this is the eval-mode (running-stats) forward.

    pad = (KH - 1) // 2
    OH = (H + 2 * pad - KH) // stride + 1
    OW = (W + 2 * pad - KW) // stride + 1

    # ---- im2col (XLA side, fused under jit): (B*OH*OW, KH*KW*C_in) ----
    x_nhwc = jnp.transpose(x, (0, 2, 3, 1))
    x_p = jnp.pad(x_nhwc, ((0, 0), (pad, pad), (pad, pad), (0, 0)))
    cols = []
    for kh in range(KH):
        for kw in range(KW):
            cols.append(
                x_p[:,
                    kh:kh + (OH - 1) * stride + 1:stride,
                    kw:kw + (OW - 1) * stride + 1:stride,
                    :])
    patches = jnp.concatenate(cols, axis=-1)          # (B, OH, OW, KH*KW*C_in)

    M = B * OH * OW
    K = KH * KW * C_in
    N = C_out
    a2d = patches.reshape(M, K)

    # PyTorch weight (C_out, C_in, KH, KW) -> (KH*KW*C_in, C_out), matching the
    # patch channel ordering (kh-major, then kw, then c_in).
    w2d = jnp.transpose(w, (2, 3, 1, 0)).reshape(K, N)

    # Fold BN (+ optional conv bias) into per-channel scale & bias.
    scale = gamma / jnp.sqrt(running_var + eps)
    bias = beta - running_mean * scale
    if conv_bias is not None:
        bias = bias + conv_bias * scale
    scale2d = scale.reshape(1, N).astype(jnp.float32)
    bias2d = bias.reshape(1, N).astype(jnp.float32)

    # ---- tile selection (obeys the (8,128) block rule; ragged M/N tails are
    # safe because out-of-range writes are masked; K is only tiled when it
    # divides evenly so no garbage enters the accumulator) ----
    tm = M if M <= tm_target else (tm_target // 8) * 8
    tn = N if N <= tn_target else (tn_target // 128) * 128
    if K % 512 == 0:
        tk = 512
    elif K % 256 == 0:
        tk = 256
    elif K % 128 == 0:
        tk = 128
    else:
        tk = K

    grid = (pl.cdiv(M, tm), pl.cdiv(N, tn), K // tk)

    out2d = pl.pallas_call(
        _conv_bn_silu_kernel,
        out_shape=jax.ShapeDtypeStruct((M, N), x.dtype),
        grid_spec=pltpu.PrefetchScalarGridSpec(
            num_scalar_prefetch=0,
            grid=grid,
            in_specs=[
                pl.BlockSpec((tm, tk), lambda i, j, k: (i, k)),
                pl.BlockSpec((tk, tn), lambda i, j, k: (k, j)),
                pl.BlockSpec((1, tn), lambda i, j, k: (0, j)),
                pl.BlockSpec((1, tn), lambda i, j, k: (0, j)),
            ],
            out_specs=pl.BlockSpec((tm, tn), lambda i, j, k: (i, j)),
            scratch_shapes=[pltpu.VMEM((tm, tn), jnp.float32)],
        ),
        compiler_params=pltpu.CompilerParams(
            dimension_semantics=("parallel", "parallel", "arbitrary"),
        ),
    )(a2d, w2d, scale2d, bias2d)

    out = out2d.reshape(B, OH, OW, N)
    return jnp.transpose(out, (0, 3, 1, 2))           # back to NCHW


if __name__ == "__main__":
    key = jax.random.PRNGKey(0)
    kx, kw, kg, kb, km, kv = jax.random.split(key, 6)

    # Small shapes consistent with BaseConv: batch=2, in_ch=4, out_ch=8, 16x16.
    B, C_in, H, W = 2, 4, 16, 16
    C_out, ksize, stride = 8, 3, 1
    eps = 1e-3  # matches nn.BatchNorm2d(momentum=0.03, eps=0.001)

    x = jax.random.normal(kx, (B, C_in, H, W), dtype=jnp.float32)
    w = 0.2 * jax.random.normal(kw, (C_out, C_in, ksize, ksize), dtype=jnp.float32)
    gamma = 1.0 + 0.1 * jax.random.normal(kg, (C_out,), dtype=jnp.float32)
    beta = 0.1 * jax.random.normal(kb, (C_out,), dtype=jnp.float32)
    running_mean = 0.1 * jax.random.normal(km, (C_out,), dtype=jnp.float32)
    running_var = jnp.abs(1.0 + 0.1 * jax.random.normal(kv, (C_out,), dtype=jnp.float32))

    fn = jax.jit(functools.partial(conv_bn_silu, stride=stride, eps=eps))
    out = fn(x, w, None, gamma, beta, running_mean, running_var)
    out = jax.block_until_ready(out)

    # ---- plain-JAX reference: Conv2d -> BN(eval) -> SiLU ----
    pad = (ksize - 1) // 2
    conv_ref = jax.lax.conv_general_dilated(
        x, w, window_strides=(stride, stride),
        padding=((pad, pad), (pad, pad)),
        dimension_numbers=("NCHW", "OIHW", "NCHW"),
        precision=jax.lax.Precision.HIGHEST)
    scale_ref = gamma / jnp.sqrt(running_var + eps)
    bias_ref = beta - running_mean * scale_ref
    bn_ref = conv_ref * scale_ref[None, :, None, None] + bias_ref[None, :, None, None]
    ref = bn_ref * jax.nn.sigmoid(bn_ref)

    assert out.shape == ref.shape and out.dtype == ref.dtype
    max_err = float(jnp.max(jnp.abs(out - ref)))
    assert jnp.allclose(out, ref, atol=1e-2, rtol=1e-2), max_err

    print("KERNEL_OK")
</pallas_src>

<mosaic_0001>
module attributes {stable_mosaic.version = 11 : i64} {
  func.func @_conv_bn_silu_kernel(%arg0: i32, %arg1: i32, %arg2: i32, %arg3: memref<256x36xf32, #tpu.memory_space<vmem>>, %arg4: memref<36x8xf32, #tpu.memory_space<vmem>>, %arg5: memref<1x8xf32, #tpu.memory_space<vmem>>, %arg6: memref<1x8xf32, #tpu.memory_space<vmem>>, %arg7: memref<256x8xf32, #tpu.memory_space<vmem>>, %arg8: memref<256x8xf32, #tpu.memory_space<vmem>>) attributes {dimension_semantics = [#tpu.dimension_semantics<parallel>, #tpu.dimension_semantics<parallel>, #tpu.dimension_semantics<arbitrary>], iteration_bounds = array<i64: 2, 1, 1>, scalar_prefetch = 0 : i64, scratch_operands = 1 : i64, tpu.core_type = #tpu.core_type<tc>, window_params = [{transform_indices = @transform_0, window_bounds = array<i64: 256, 36>}, {transform_indices = @transform_1, window_bounds = array<i64: 36, 8>}, {transform_indices = @transform_2, window_bounds = array<i64: 1, 8>}, {transform_indices = @transform_3, window_bounds = array<i64: 1, 8>}, {transform_indices = @transform_4, window_bounds = array<i64: 256, 8>}]} {
    %c0_i32 = arith.constant 0 : i32
    %0 = arith.cmpi eq, %arg2, %c0_i32 : i32
    %1 = arith.extui %0 : i1 to i32
    %c0_i32_0 = arith.constant 0 : i32
    %2 = arith.cmpi ne, %1, %c0_i32_0 : i32
    scf.if %2 {
      %cst_10 = arith.constant 0.000000e+00 : f32
      %12 = vector.broadcast %cst_10 : f32 to vector<256x8xf32>
      %c0_11 = arith.constant 0 : index
      %c0_12 = arith.constant 0 : index
      %13 = vector.load %arg8[%c0_11, %c0_12] : memref<256x8xf32, #tpu.memory_space<vmem>>, vector<256x8xf32>
      tpu.vector_store %arg8[%c0_11, %c0_12], %12 {strides = array<i32>} : memref<256x8xf32, #tpu.memory_space<vmem>>, vector<256x8xf32>,
    } else {
    }
    %c0 = arith.constant 0 : index
    %c0_1 = arith.constant 0 : index
    %3 = vector.load %arg8[%c0, %c0_1] : memref<256x8xf32, #tpu.memory_space<vmem>>, vector<256x8xf32>
    %c0_2 = arith.constant 0 : index
    %c0_3 = arith.constant 0 : index
    %4 = vector.load %arg3[%c0_2, %c0_3] : memref<256x36xf32, #tpu.memory_space<vmem>>, vector<256x36xf32>
    %c0_4 = arith.constant 0 : index
    %c0_5 = arith.constant 0 : index
    %5 = vector.load %arg4[%c0_4, %c0_5] : memref<36x8xf32, #tpu.memory_space<vmem>>, vector<36x8xf32>
    %cst = arith.constant dense<0.000000e+00> : vector<256x8xf32>
    %6 = tpu.matmul %4, %5, %cst {dimension_numbers = #tpu.dot_dimension_numbers<[1], [0], [0], [1], [0, 0, 1, 1], [], []>} : vector<256x36xf32>, vector<36x8xf32>, vector<256x8xf32> -> vector<256x8xf32>
    %7 = arith.addf %3, %6 : vector<256x8xf32>
    %c0_6 = arith.constant 0 : index
    %c0_7 = arith.constant 0 : index
    %8 = vector.load %arg8[%c0_6, %c0_7] : memref<256x8xf32, #tpu.memory_space<vmem>>, vector<256x8xf32>
    tpu.vector_store %arg8[%c0_6, %c0_7], %7 {strides = array<i32>} : memref<256x8xf32, #tpu.memory_space<vmem>>, vector<256x8xf32>,
    %c0_i32_8 = arith.constant 0 : i32
    %9 = arith.cmpi eq, %arg2, %c0_i32_8 : i32
    %10 = arith.extui %9 : i1 to i32
    %c0_i32_9 = arith.constant 0 : i32
    %11 = arith.cmpi ne, %10, %c0_i32_9 : i32
    scf.if %11 {
      %c0_10 = arith.constant 0 : index
      %c0_11 = arith.constant 0 : index
      %12 = vector.load %arg8[%c0_10, %c0_11] : memref<256x8xf32, #tpu.memory_space<vmem>>, vector<256x8xf32>
      %c0_12 = arith.constant 0 : index
      %c0_13 = arith.constant 0 : index
      %13 = vector.load %arg5[%c0_12, %c0_13] : memref<1x8xf32, #tpu.memory_space<vmem>>, vector<1x8xf32>
      %14 = vector.broadcast %13 : vector<1x8xf32> to vector<256x8xf32>
      %15 = arith.mulf %12, %14 : vector<256x8xf32>
      %c0_14 = arith.constant 0 : index
      %c0_15 = arith.constant 0 : index
      %16 = vector.load %arg6[%c0_14, %c0_15] : memref<1x8xf32, #tpu.memory_space<vmem>>, vector<1x8xf32>
      %17 = vector.broadcast %16 : vector<1x8xf32> to vector<256x8xf32>
      %18 = arith.addf %15, %17 : vector<256x8xf32>
      %19 = arith.negf %18 : vector<256x8xf32>
      %20 = math.exp %19 : vector<256x8xf32>
      %cst_16 = arith.constant 1.000000e+00 : f32
      %21 = vector.broadcast %cst_16 : f32 to vector<256x8xf32>
      %22 = arith.addf %21, %20 : vector<256x8xf32>
      %23 = arith.divf %21, %22 : vector<256x8xf32>
      %24 = arith.mulf %18, %23 : vector<256x8xf32>
      %c0_17 = arith.constant 0 : index
      %c0_18 = arith.constant 0 : index
      %25 = vector.load %arg7[%c0_17, %c0_18] : memref<256x8xf32, #tpu.memory_space<vmem>>, vector<256x8xf32>
      tpu.vector_store %arg7[%c0_17, %c0_18], %24 {strides = array<i32>} : memref<256x8xf32, #tpu.memory_space<vmem>>, vector<256x8xf32>,
    } else {
    }
    return
  }
  func.func @transform_0(%arg0: i32, %arg1: i32, %arg2: i32) -> (i32, i32) {
    %c0_i32 = arith.constant 0 : i32
    return %arg0, %arg2 : i32, i32
  }
  func.func @transform_1(%arg0: i32, %arg1: i32, %arg2: i32) -> (i32, i32) {
    %c0_i32 = arith.constant 0 : i32
    return %arg2, %arg1 : i32, i32
  }
  func.func @transform_2(%arg0: i32, %arg1: i32, %arg2: i32) -> (i32, i32) {
    %c0_i32 = arith.constant 0 : i32
    %c0_i32_0 = arith.constant 0 : i32
    return %c0_i32, %arg1 : i32, i32
  }
  func.func @transform_3(%arg0: i32, %arg1: i32, %arg2: i32) -> (i32, i32) {
    %c0_i32 = arith.constant 0 : i32
    %c0_i32_0 = arith.constant 0 : i32
    return %c0_i32, %arg1 : i32, i32
  }
  func.func @transform_4(%arg0: i32, %arg1: i32, %arg2: i32) -> (i32, i32) {
    %c0_i32 = arith.constant 0 : i32
    return %arg0, %arg1 : i32, i32
  }
}

</mosaic_0001>

<llo_original>
// kernel: conv_bn_silu.1
$region0: #{conv_bn_silu.1}
  #allocation0 [shape = 'u32[]', space=smem, size = 0x4, offset = 0x4, fixed_abs, tag = 'smem constant byte address 0x4 - core index']
  #allocation1 [shape = 'u32[144,128]{1,0:T(1,128)}', space=vmem, size = 0x12000, scoped, tag = 'internal scratch']
  #allocation2 [shape = 'f32[256,8]{1,0:T(8,128)}', space=vmem, size = 0x20000, scoped, tag = 'scratch operand']
  %s0 = inlined_call_operand.vmem [shape: f32[512,36], index: 0, kind: input, shape index: {}]
  %s1 = inlined_call_operand.vmem [shape: f32[36,8], index: 1, kind: input, shape index: {}]
  %s2 = inlined_call_operand.vmem [shape: f32[1,8], index: 2, kind: input, shape index: {}]
  %s3 = inlined_call_operand.vmem [shape: f32[1,8], index: 3, kind: input, shape index: {}]
  %s4 = inlined_call_operand.vmem [shape: f32[512,8], index: 4, kind: output, shape index: {}]
  %s5 = sld [smem:[#allocation0]]
  $region57: #{conv_bn_silu.1} parent=0
    _
  %s7 = ssub.s32 1, %s5
  %s8 = scalar_select 0, %s7, %s5
  loop: start=0, step=1, limit=4
  $region2: #{conv_bn_silu.1} parent=0 // loop_pre_header
    _
  $region3: #{conv_bn_silu.1} parent=0 // loop_header
    %s10 = sphi 0, %s14
    %p11 = scmp.ge.s32.totalorder %s10, 4
    %s17 = sphi 0, %s36
    %s18 = sphi 0, %s32
    %s19 = sphi 0, %s28
    %s20 = sphi 0, %s17
    %s21 = sphi 0, %s18
    %s22 = sphi 0, %s19
    %s23 = sphi 0, %s20
    %s24 = sphi 0, %s21
    %s25 = sphi 0, %s22
    %s41 = sphi 0, %s43
    %s44 = sphi 0, %s41
    %s45 = sphi 0, %s44
    %s61 = sphi 0, %s45
    %s69 = sphi 0, %s71
    %s72 = sphi 0, %s69
    %s73 = sphi 0, %s72
    %s89 = sphi 0, %s73
    %s95 = sphi 0, %s97
    %s98 = sphi 0, %s95
    %s99 = sphi 0, %s98
    %s115 = sphi 0, %s99
    %s121 = sphi 0, %s123
    %s124 = sphi 0, %s121
    %s125 = sphi 0, %s124
    %s141 = sphi 0, %s125
    %s149 = sphi 0, %s151
    %s152 = sphi 0, %s149
    %s153 = sphi 0, %s152
    %s169 = sphi 0, %s153
  $region4: #{conv_bn_silu.1} parent=0 // loop_header_branch
    %13 = sbr.rel (%p11) target = $region8
  $region5: #{conv_bn_silu.1} parent=0 // loop_body
    %s15 = ssub.s32 %s10, 1
    %s16 = ssub.s32 %s10, 2
    %s26 = sadd.s32 1, %s19
    %p27 = scmp.ge.s32.totalorder %s26, 1
    %s28 = scalar_select %p27, 0, %s26
    %s29 = sadd.s32 1, %s18
    %s30 = scalar_select %p27, %s29, %s18
    %p31 = scmp.ge.s32.totalorder %s30, 1
    %s32 = scalar_select %p31, 0, %s30
    %s33 = sadd.s32 1, %s17
    %s34 = scalar_select %p31, %s33, %s17
    %p35 = scmp.ge.s32.totalorder %s34, 2
    %s36 = scalar_select %p35, 0, %s34
    %s37 = ssub.s32 %s17, %s36
    %s38 = ssub.s32 %s19, %s28
    %s39 = sor.u32 %s37, %s38
    %p40 = scmp.eq.s32.totalorder %s39, 0
    %s42 = sadd.s32 %s41, 1
    %s43 = scalar_select %p40, %s41, %s42
    %p46 = pneg %p40
    %p47 = scmp.eq.s32.totalorder %s10, 1
    %p48 = por %p46, %p47
    %p49 = scmp.ne.s32.totalorder %s41, %s44
    %p50 = scmp.eq.s32.totalorder %s10, 0
    %p51 = por %p49, %p50
    %p52 = scmp.ne.s32.totalorder %s41, %s44
    %p53 = scmp.eq.s32.totalorder %s15, 1
    %p54 = por %p52, %p53
    %p55 = scmp.ne.s32.totalorder %s44, %s45
    %p56 = scmp.eq.s32.totalorder %s15, 0
    %p57 = por %p55, %p56
    %p58 = scmp.ne.s32.totalorder %s44, %s45
    %p59 = scmp.eq.s32.totalorder %s16, 1
    %p60 = por %p58, %p59
    %p62 = scmp.ne.s32.totalorder %s45, %s61
    %p63 = scmp.eq.s32.totalorder %s16, 0
    %p64 = por %p62, %p63
    %s65 = ssub.s32 %s19, %s28
    %s66 = ssub.s32 %s18, %s32
    %s67 = sor.u32 %s65, %s66
    %p68 = scmp.eq.s32.totalorder %s67, 0
    %s70 = sadd.s32 %s69, 1
    %s71 = scalar_select %p68, %s69, %s70
    %p74 = pneg %p68
    %p75 = scmp.eq.s32.totalorder %s10, 1
    %p76 = por %p74, %p75
    %p77 = scmp.ne.s32.totalorder %s69, %s72
    %p78 = scmp.eq.s32.totalorder %s10, 0
    %p79 = por %p77, %p78
    %p80 = scmp.ne.s32.totalorder %s69, %s72
    %p81 = scmp.eq.s32.totalorder %s15, 1
    %p82 = por %p80, %p81
    %p83 = scmp.ne.s32.totalorder %s72, %s73
    %p84 = scmp.eq.s32.totalorder %s15, 0
    %p85 = por %p83, %p84
    %p86 = scmp.ne.s32.totalorder %s72, %s73
    %p87 = scmp.eq.s32.totalorder %s16, 1
    %p88 = por %p86, %p87
    %p90 = scmp.ne.s32.totalorder %s73, %s89
    %p91 = scmp.eq.s32.totalorder %s16, 0
    %p92 = por %p90, %p91
    %s93 = ssub.s32 %s18, %s32
    %p94 = scmp.eq.s32.totalorder %s93, 0
    %s96 = sadd.s32 %s95, 1
    %s97 = scalar_select %p94, %s95, %s96
    %p100 = pneg %p94
    %p101 = scmp.eq.s32.totalorder %s10, 1
    %p102 = por %p100, %p101
    %p103 = scmp.ne.s32.totalorder %s95, %s98
    %p104 = scmp.eq.s32.totalorder %s10, 0
    %p105 = por %p103, %p104
    %p106 = scmp.ne.s32.totalorder %s95, %s98
    %p107 = scmp.eq.s32.totalorder %s15, 1
    %p108 = por %p106, %p107
    %p109 = scmp.ne.s32.totalorder %s98, %s99
    %p110 = scmp.eq.s32.totalorder %s15, 0
    %p111 = por %p109, %p110
    %p112 = scmp.ne.s32.totalorder %s98, %s99
    %p113 = scmp.eq.s32.totalorder %s16, 1
    %p114 = por %p112, %p113
    %p116 = scmp.ne.s32.totalorder %s99, %s115
    %p117 = scmp.eq.s32.totalorder %s16, 0
    %p118 = por %p116, %p117
    %s119 = ssub.s32 %s18, %s32
    %p120 = scmp.eq.s32.totalorder %s119, 0
    %s122 = sadd.s32 %s121, 1
    %s123 = scalar_select %p120, %s121, %s122
    %p126 = pneg %p120
    %p127 = scmp.eq.s32.totalorder %s10, 1
    %p128 = por %p126, %p127
    %p129 = scmp.ne.s32.totalorder %s121, %s124
    %p130 = scmp.eq.s32.totalorder %s10, 0
    %p131 = por %p129, %p130
    %p132 = scmp.ne.s32.totalorder %s121, %s124
    %p133 = scmp.eq.s32.totalorder %s15, 1
    %p134 = por %p132, %p133
    %p135 = scmp.ne.s32.totalorder %s124, %s125
    %p136 = scmp.eq.s32.totalorder %s15, 0
    %p137 = por %p135, %p136
    %p138 = scmp.ne.s32.totalorder %s124, %s125
    %p139 = scmp.eq.s32.totalorder %s16, 1
    %p140 = por %p138, %p139
    %p142 = scmp.ne.s32.totalorder %s125, %s141
    %p143 = scmp.eq.s32.totalorder %s16, 0
    %p144 = por %p142, %p143
    %s145 = ssub.s32 %s17, %s36
    %s146 = ssub.s32 %s18, %s32
    %s147 = sor.u32 %s145, %s146
    %p148 = scmp.eq.s32.totalorder %s147, 0
    %s150 = sadd.s32 %s149, 1
    %s151 = scalar_select %p148, %s149, %s150
    %p154 = pneg %p148
    %p155 = scmp.eq.s32.totalorder %s10, 1
    %p156 = por %p154, %p155
    %p157 = scmp.ne.s32.totalorder %s149, %s152
    %p158 = scmp.eq.s32.totalorder %s10, 0
    %p159 = por %p157, %p158
    %p160 = scmp.ne.s32.totalorder %s149, %s152
    %p161 = scmp.eq.s32.totalorder %s15, 1
    %p162 = por %p160, %p161
    %p163 = scmp.ne.s32.totalorder %s152, %s153
    %p164 = scmp.eq.s32.totalorder %s15, 0
    %p165 = por %p163, %p164
    %p166 = scmp.ne.s32.totalorder %s152, %s153
    %p167 = scmp.eq.s32.totalorder %s16, 1
    %p168 = por %p166, %p167
    %p170 = scmp.ne.s32.totalorder %s153, %s169
    %p171 = scmp.eq.s32.totalorder %s16, 0
    %p172 = por %p170, %p171
    %p173 = scmp.le.s32.totalorder 1, %s10
    %p174 = scmp.lt.s32.totalorder %s10, 3
    %p175 = pnand %p173, %p174
    %p176 = pneg %p175
    // Predicated region
    $region9: #{conv_bn_silu.1} parent=5 // pred_check
      _
    $region10: #{conv_bn_silu.1} parent=5 // pred_check_branch
      %178 = sbr.rel (%p175) target = $region12
    $region11: #{conv_bn_silu.1} parent=5 // pred_region
      %s179 = ssub.s32 %s10, 1
      // Predicated region
      $region13: #{conv_bn_silu.1} parent=11 // pred_check
        %p180 = pneg %p85
      $region14: #{conv_bn_silu.1} parent=11 // pred_check_branch
        %182 = sbr.rel (%p180) target = $region16
      $region15: #{conv_bn_silu.1} parent=11 // pred_region
        %s183 = smul.u32 5, %s22
        %p184 = scmp.lt.s32.totalorder %s183, 4
        %s185 = scalar_select %p184, %s183, 4
        %p186 = scmp.lt.s32.totalorder %s21, 0
        %s187 = scalar_select %p186, %s21, 0
        %s188 = sadd.s32 %s187, %s185
        %s189 = smul.addr %s188, 8
        %s190 = scalar_lea.vmem %s1, %s189
        %s191 = smul.u32 5, %s22
      $region16: #{conv_bn_silu.1} parent=11 // pred_fallthru
        _
      // Predicated region
      $region17: #{conv_bn_silu.1} parent=11 // pred_check
        %p192 = pneg %p111
      $region18: #{conv_bn_silu.1} parent=11 // pred_check_branch
        %194 = sbr.rel (%p192) target = $region20
      $region19: #{conv_bn_silu.1} parent=11 // pred_region
        %p195 = scmp.lt.s32.totalorder %s21, 0
        %s196 = scalar_select %p195, %s21, 0
        %s197 = scalar_lea.vmem %s2, %s196
      $region20: #{conv_bn_silu.1} parent=11 // pred_fallthru
        _
      // Predicated region
      $region21: #{conv_bn_silu.1} parent=11 // pred_check
        %p198 = pneg %p137
      $region22: #{conv_bn_silu.1} parent=11 // pred_check_branch
        %200 = sbr.rel (%p198) target = $region24
      $region23: #{conv_bn_silu.1} parent=11 // pred_region
        %p201 = scmp.lt.s32.totalorder %s21, 0
        %s202 = scalar_select %p201, %s21, 0
        %s203 = scalar_lea.vmem %s3, %s202
      $region24: #{conv_bn_silu.1} parent=11 // pred_fallthru
        _
    $region12: #{conv_bn_silu.1} parent=5 // pred_fallthru
      _
    %p204 = scmp.lt.s32.totalorder %s10, 2
    // Predicated region
    $region25: #{conv_bn_silu.1} parent=5 // pred_check
      %p205 = pneg %p204
    $region26: #{conv_bn_silu.1} parent=5 // pred_check_branch
      %207 = sbr.rel (%p205) target = $region28
    $region27: #{conv_bn_silu.1} parent=5 // pred_region
      // Predicated region
      $region29: #{conv_bn_silu.1} parent=27 // pred_check
        %p208 = pneg %p51
      $region30: #{conv_bn_silu.1} parent=27 // pred_check_branch
        %210 = sbr.rel (%p208) target = $region32
      $region31: #{conv_bn_silu.1} parent=27 // pred_region
        %s211 = smul.u32 32, %s17
        %p212 = scmp.lt.s32.totalorder %s211, 63
        %s213 = scalar_select %p212, %s211, 63
        %p214 = scmp.lt.s32.totalorder %s19, 0
        %s215 = scalar_select %p214, %s19, 0
        %s216 = sadd.s32 %s215, %s213
        %s217 = smul.addr %s216, 8
        %s218 = scalar_lea.vmem %s0, %s217
        %s219 = smul.u32 32, %s17
      $region32: #{conv_bn_silu.1} parent=27 // pred_fallthru
        _
    $region28: #{conv_bn_silu.1} parent=5 // pred_fallthru
      _
    %p220 = scmp.le.s32.totalorder 1, %s10
    %p221 = scmp.lt.s32.totalorder %s10, 3
    %p222 = pnand %p220, %p221
    %p223 = pneg %p222
    // Predicated region
    $region33: #{conv_bn_silu.1} parent=5 // pred_check
      _
    $region34: #{conv_bn_silu.1} parent=5 // pred_check_branch
      %225 = sbr.rel (%p222) target = $region36
    $region35: #{conv_bn_silu.1} parent=5 // pred_region
      %s226 = ssub.s32 %s10, 1
      %s227 = smul.u32 32, %s20
      %p228 = scmp.lt.s32.totalorder %s227, 63
      %s229 = scalar_select %p228, %s227, 63
      %p230 = scmp.lt.s32.totalorder %s22, 0
      %s231 = scalar_select %p230, %s22, 0
      %s232 = sadd.s32 %s231, %s229
      %s233 = smul.addr %s232, 8
      %s234 = scalar_lea.vmem %s0, %s233
      %p235 = pneg %p57
      %p236 = pneg %p54
      %s237 = smul.u32 5, %s22
      %p238 = scmp.lt.s32.totalorder %s237, 4
      %s239 = scalar_select %p238, %s237, 4
      %p240 = scmp.lt.s32.totalorder %s21, 0
      %s241 = scalar_select %p240, %s21, 0
      %s242 = sadd.s32 %s241, %s239
      %s243 = smul.addr %s242, 8
      %s244 = scalar_lea.vmem %s1, %s243
      %p245 = pneg %p85
      %p246 = pneg %p82
      %p247 = scmp.lt.s32.totalorder %s21, 0
      %s248 = scalar_select %p247, %s21, 0
      %s249 = scalar_lea.vmem %s2, %s248
      %p250 = pneg %p111
      %p251 = pneg %p108
      %p252 = scmp.lt.s32.totalorder %s21, 0
      %s253 = scalar_select %p252, %s21, 0
      %s254 = scalar_lea.vmem %s3, %s253
      %p255 = pneg %p137
      %p256 = pneg %p134
      %p257 = pneg %p165
      %p258 = pneg %p162
      %s259 = smul.u32 32, %s20
      %p260 = scmp.lt.s32.totalorder %s259, 63
      %s261 = scalar_select %p260, %s259, 63
      %p262 = scmp.lt.s32.totalorder %s21, 0
      %s263 = scalar_select %p262, %s21, 0
      %s264 = sadd.s32 %s263, %s261
      %s265 = smul.addr %s264, 8
      %s266 = scalar_lea.vmem %s4, %s265
      %s267 = smul.u32 32, %s20
      %p268 = scmp.lt.s32.totalorder %s267, 63
      %s269 = scalar_select %p268, %s267, 63
      %p270 = scmp.lt.s32.totalorder %s22, 0
      %s271 = scalar_select %p270, %s22, 0
      %s272 = sadd.s32 %s271, %s269
      %s273 = smul.addr %s272, 8
      %s274 = scalar_lea.vmem %s0, %s273
      %s275 = smul.u32 32, %s20
      %s276 = smul.u32 5, %s22
      %p277 = scmp.lt.s32.totalorder %s276, 4
      %s278 = scalar_select %p277, %s276, 4
      %p279 = scmp.lt.s32.totalorder %s21, 0
      %s280 = scalar_select %p279, %s21, 0
      %s281 = sadd.s32 %s280, %s278
      %s282 = smul.addr %s281, 8
      %s283 = scalar_lea.vmem %s1, %s282
      %s284 = smul.u32 5, %s22
      %p285 = scmp.lt.s32.totalorder %s21, 0
      %s286 = scalar_select %p285, %s21, 0
      %s287 = scalar_lea.vmem %s2, %s286
      %p288 = scmp.lt.s32.totalorder %s21, 0
      %s289 = scalar_select %p288, %s21, 0
      %s290 = scalar_lea.vmem %s3, %s289
      %s291 = smul.u32 32, %s20
      %p292 = scmp.lt.s32.totalorder %s291, 63
      %s293 = scalar_select %p292, %s291, 63
      %p294 = scmp.lt.s32.totalorder %s21, 0
      %s295 = scalar_select %p294, %s21, 0
      %s296 = sadd.s32 %s295, %s293
      %s297 = smul.addr %s296, 8
      %s298 = scalar_lea.vmem %s4, %s297
      %s299 = smul.u32 32, %s20
      %p300 = scmp.eq.s32.totalorder %s22, 0
      // Predicated region
      $region37: #{conv_bn_silu.1} parent=35 // pred_check
        %p301 = pneg %p300
      $region38: #{conv_bn_silu.1} parent=35 // pred_check_branch
        %303 = sbr.rel (%p301) target = $region40
      $region39: #{conv_bn_silu.1} parent=35 // pred_region
        %vm304 = vcmask 64512
        %305 = vst.msk [vmem:[#allocation2] sm:$0xff] %vm304, 0.0
        %306 = vst.msk [vmem:[#allocation2 + $0x8] sm:$0xff] %vm304, 0.0
        %307 = vst.msk [vmem:[#allocation2 + $0x10] sm:$0xff] %vm304, 0.0
        %308 = vst.msk [vmem:[#allocation2 + $0x18] sm:$0xff] %vm304, 0.0
        %309 = vst.msk [vmem:[#allocation2 + $0x20] sm:$0xff] %vm304, 0.0
        %310 = vst.msk [vmem:[#allocation2 + $0x28] sm:$0xff] %vm304, 0.0
        %311 = vst.msk [vmem:[#allocation2 + $0x30] sm:$0xff] %vm304, 0.0
        %312 = vst.msk [vmem:[#allocation2 + $0x38] sm:$0xff] %vm304, 0.0
        %313 = vst.msk [vmem:[#allocation2 + $0x40] sm:$0xff] %vm304, 0.0
        %314 = vst.msk [vmem:[#allocation2 + $0x48] sm:$0xff] %vm304, 0.0
        %315 = vst.msk [vmem:[#allocation2 + $0x50] sm:$0xff] %vm304, 0.0
        %316 = vst.msk [vmem:[#allocation2 + $0x58] sm:$0xff] %vm304, 0.0
        %317 = vst.msk [vmem:[#allocation2 + $0x60] sm:$0xff] %vm304, 0.0
        %318 = vst.msk [vmem:[#allocation2 + $0x68] sm:$0xff] %vm304, 0.0
        %319 = vst.msk [vmem:[#allocation2 + $0x70] sm:$0xff] %vm304, 0.0
        %320 = vst.msk [vmem:[#allocation2 + $0x78] sm:$0xff] %vm304, 0.0
        %321 = vst.msk [vmem:[#allocation2 + $0x80] sm:$0xff] %vm304, 0.0
        %322 = vst.msk [vmem:[#allocation2 + $0x88] sm:$0xff] %vm304, 0.0
        %323 = vst.msk [vmem:[#allocation2 + $0x90] sm:$0xff] %vm304, 0.0
        %324 = vst.msk [vmem:[#allocation2 + $0x98] sm:$0xff] %vm304, 0.0
        %325 = vst.msk [vmem:[#allocation2 + $0xa0] sm:$0xff] %vm304, 0.0
        %326 = vst.msk [vmem:[#allocation2 + $0xa8] sm:$0xff] %vm304, 0.0
        %327 = vst.msk [vmem:[#allocation2 + $0xb0] sm:$0xff] %vm304, 0.0
        %328 = vst.msk [vmem:[#allocation2 + $0xb8] sm:$0xff] %vm304, 0.0
        %329 = vst.msk [vmem:[#allocation2 + $0xc0] sm:$0xff] %vm304, 0.0
        %330 = vst.msk [vmem:[#allocation2 + $0xc8] sm:$0xff] %vm304, 0.0
        %331 = vst.msk [vmem:[#allocation2 + $0xd0] sm:$0xff] %vm304, 0.0
        %332 = vst.msk [vmem:[#allocation2 + $0xd8] sm:$0xff] %vm304, 0.0
        %333 = vst.msk [vmem:[#allocation2 + $0xe0] sm:$0xff] %vm304, 0.0
        %334 = vst.msk [vmem:[#allocation2 + $0xe8] sm:$0xff] %vm304, 0.0
        %335 = vst.msk [vmem:[#allocation2 + $0xf0] sm:$0xff] %vm304, 0.0
        %336 = vst.msk [vmem:[#allocation2 + $0xf8] sm:$0xff] %vm304, 0.0
      $region40: #{conv_bn_silu.1} parent=35 // pred_fallthru
        _
      %v337 = vld [vmem:[#allocation2] sm:$0xff]
      %v338 = vld [vmem:[#allocation2 + $0x8] sm:$0xff]
      %v339 = vld [vmem:[#allocation2 + $0x10] sm:$0xff]
      %v340 = vld [vmem:[#allocation2 + $0x18] sm:$0xff]
      %v341 = vld [vmem:[#allocation2 + $0x20] sm:$0xff]
      %v342 = vld [vmem:[#allocation2 + $0x28] sm:$0xff]
      %v343 = vld [vmem:[#allocation2 + $0x30] sm:$0xff]
      %v344 = vld [vmem:[#allocation2 + $0x38] sm:$0xff]
      %v345 = vld [vmem:[#allocation2 + $0x40] sm:$0xff]
      %v346 = vld [vmem:[#allocation2 + $0x48] sm:$0xff]
      %v347 = vld [vmem:[#allocation2 + $0x50] sm:$0xff]
      %v348 = vld [vmem:[#allocation2 + $0x58] sm:$0xff]
      %v349 = vld [vmem:[#allocation2 + $0x60] sm:$0xff]
      %v350 = vld [vmem:[#allocation2 + $0x68] sm:$0xff]
      %v351 = vld [vmem:[#allocation2 + $0x70] sm:$0xff]
      %v352 = vld [vmem:[#allocation2 + $0x78] sm:$0xff]
      %v353 = vld [vmem:[#allocation2 + $0x80] sm:$0xff]
      %v354 = vld [vmem:[#allocation2 + $0x88] sm:$0xff]
      %v355 = vld [vmem:[#allocation2 + $0x90] sm:$0xff]
      %v356 = vld [vmem:[#allocation2 + $0x98] sm:$0xff]
      %v357 = vld [vmem:[#allocation2 + $0xa0] sm:$0xff]
      %v358 = vld [vmem:[#allocation2 + $0xa8] sm:$0xff]
      %v359 = vld [vmem:[#allocation2 + $0xb0] sm:$0xff]
      %v360 = vld [vmem:[#allocation2 + $0xb8] sm:$0xff]
      %v361 = vld [vmem:[#allocation2 + $0xc0] sm:$0xff]
      %v362 = vld [vmem:[#allocation2 + $0xc8] sm:$0xff]
      %v363 = vld [vmem:[#allocation2 + $0xd0] sm:$0xff]
      %v364 = vld [vmem:[#allocation2 + $0xd8] sm:$0xff]
      %v365 = vld [vmem:[#allocation2 + $0xe0] sm:$0xff]
      %v366 = vld [vmem:[#allocation2 + $0xe8] sm:$0xff]
      %v367 = vld [vmem:[#allocation2 + $0xf0] sm:$0xff]
      %v368 = vld [vmem:[#allocation2 + $0xf8] sm:$0xff]
      %v369 = vld [vmem:[%s274] sm:$0xff]
      %v370 = vld [vmem:[%s274 + $0x8] sm:$0xff]
      %v371 = vld [vmem:[%s274 + $0x10] sm:$0xff]
      %v372 = vld [vmem:[%s274 + $0x18] sm:$0xff]
      %v373 = vld [vmem:[%s274 + $0x20] sm:$0xff]
      %v374 = vld [vmem:[%s274 + $0x28] sm:$0xff]
      %v375 = vld [vmem:[%s274 + $0x30] sm:$0xff]
      %v376 = vld [vmem:[%s274 + $0x38] sm:$0xff]
      %v377 = vld [vmem:[%s274 + $0x40] sm:$0xff]
      %v378 = vld [vmem:[%s274 + $0x48] sm:$0xff]
      %v379 = vld [vmem:[%s274 + $0x50] sm:$0xff]
      %v380 = vld [vmem:[%s274 + $0x58] sm:$0xff]
      %v381 = vld [vmem:[%s274 + $0x60] sm:$0xff]
      %v382 = vld [vmem:[%s274 + $0x68] sm:$0xff]
      %v383 = vld [vmem:[%s274 + $0x70] sm:$0xff]
      %v384 = vld [vmem:[%s274 + $0x78] sm:$0xff]
      %v385 = vld [vmem:[%s274 + $0x80] sm:$0xff]
      %v386 = vld [vmem:[%s274 + $0x88] sm:$0xff]
      %v387 = vld [vmem:[%s274 + $0x90] sm:$0xff]
      %v388 = vld [vmem:[%s274 + $0x98] sm:$0xff]
      %v389 = vld [vmem:[%s274 + $0xa0] sm:$0xff]
      %v390 = vld [vmem:[%s274 + $0xa8] sm:$0xff]
      %v391 = vld [vmem:[%s274 + $0xb0] sm:$0xff]
      %v392 = vld [vmem:[%s274 + $0xb8] sm:$0xff]
      %v393 = vld [vmem:[%s274 + $0xc0] sm:$0xff]
      %v394 = vld [vmem:[%s274 + $0xc8] sm:$0xff]
      %v395 = vld [vmem:[%s274 + $0xd0] sm:$0xff]
      %v396 = vld [vmem:[%s274 + $0xd8] sm:$0xff]
      %v397 = vld [vmem:[%s274 + $0xe0] sm:$0xff]
      %v398 = vld [vmem:[%s274 + $0xe8] sm:$0xff]
      %v399 = vld [vmem:[%s274 + $0xf0] sm:$0xff]
      %v400 = vld [vmem:[%s274 + $0xf8] sm:$0xff]
      %v401 = vld [vmem:[%s283] sm:$0xff]
      %v402 = vld [vmem:[%s283 + $0x8] sm:$0xff]
      %v403 = vld [vmem:[%s283 + $0x10] sm:$0xff]
      %v404 = vld [vmem:[%s283 + $0x18] sm:$0xff]
      %v405 = vld [vmem:[%s283 + $0x20] sm:$0xf]
      %vm406 = vcmask 293888
      %v408 = vsel %vm406, %v369, 0
      %v411 = vsel %vm406, %v370, 0
      %v414 = vsel %vm406, %v371, 0
      %v417 = vsel %vm406, %v372, 0
      %v420 = vsel %vm406, %v373, 0
      %v423 = vsel %vm406, %v374, 0
      %v426 = vsel %vm406, %v375, 0
      %v429 = vsel %vm406, %v376, 0
      %v432 = vsel %vm406, %v377, 0
      %v435 = vsel %vm406, %v378, 0
      %v438 = vsel %vm406, %v379, 0
      %v441 = vsel %vm406, %v380, 0
      %v444 = vsel %vm406, %v381, 0
      %v447 = vsel %vm406, %v382, 0
      %v450 = vsel %vm406, %v383, 0
      %v453 = vsel %vm406, %v384, 0
      %v456 = vsel %vm406, %v385, 0
      %v459 = vsel %vm406, %v386, 0
      %v462 = vsel %vm406, %v387, 0
      %v465 = vsel %vm406, %v388, 0
      %v468 = vsel %vm406, %v389, 0
      %v471 = vsel %vm406, %v390, 0
      %v474 = vsel %vm406, %v391, 0
      %v477 = vsel %vm406, %v392, 0
      %v480 = vsel %vm406, %v393, 0
      %v483 = vsel %vm406, %v394, 0
      %v486 = vsel %vm406, %v395, 0
      %v489 = vsel %vm406, %v396, 0
      %v492 = vsel %vm406, %v397, 0
      %v495 = vsel %vm406, %v398, 0
      %v498 = vsel %vm406, %v399, 0
      %v501 = vsel %vm406, %v400, 0
      %vm503 = vcmask 1043456
      %v505 = vsel %vm503, %v405, 0
      %507 = vmatprep.subr.mxu0 0.0
      %508 = vmatpush1.msra.mxu0 %v401
      %509 = vmatprep.subr.mxu0 0.0
      %510 = vmatpush1.msra.mxu0 %v402
      %511 = vmatprep.subr.mxu0 0.0
      %512 = vmatpush1.msra.mxu0 %v403
      %513 = vmatprep.subr.mxu0 0.0
      %514 = vmatpush1.msra.mxu0 %v404
      %515 = vmatprep.subr.mxu0 0.0
      %516 = vmatpush1.msra.mxu0 %v505
      %517 = vmatprep.subr.mxu0 0.0
      %518 = vmatpush1.msra.mxu0 0.0
      %519 = vmatprep.subr.mxu0 0.0
      %520 = vmatpush1.msra.mxu0 0.0
      %521 = vmatprep.subr.mxu0 0.0
      %522 = vmatpush1.msra.mxu0 0.0
      %523 = vmatprep.subr.mxu0 0.0
      %524 = vmatpush1.msra.mxu0 0.0
      %525 = vmatprep.subr.mxu0 0.0
      %526 = vmatpush1.msra.mxu0 0.0
      %527 = vmatprep.subr.mxu0 0.0
      %528 = vmatpush1.msra.mxu0 0.0
      %529 = vmatprep.subr.mxu0 0.0
      %530 = vmatpush1.msra.mxu0 0.0
      %531 = vmatprep.subr.mxu0 0.0
      %532 = vmatpush1.msra.mxu0 0.0
      %533 = vmatprep.subr.mxu0 0.0
      %534 = vmatpush1.msra.mxu0 0.0
      %535 = vmatprep.subr.mxu0 0.0
      %536 = vmatpush1.msra.mxu0 0.0
      %537 = vmatprep.subr.mxu0 0.0
      %538 = vmatpush1.msra.mxu0 0.0
      %539 = vmatprep.subr.mxu0 0.0
      %540 = vmatpush1.msra.mxu0 0.0
      %541 = vmatprep.subr.mxu0 0.0
      %542 = vmatpush1.msra.mxu0 0.0
      %543 = vmatprep.subr.mxu0 0.0
      %544 = vmatpush1.msra.mxu0 0.0
      %545 = vmatprep.subr.mxu0 0.0
      %546 = vmatpush1.msra.mxu0 0.0
      %547 = vmatprep.subr.mxu0 0.0
      %548 = vmatpush1.msra.mxu0 0.0
      %549 = vmatprep.subr.mxu0 0.0
      %550 = vmatpush1.msra.mxu0 0.0
      %551 = vmatprep.subr.mxu0 0.0
      %552 = vmatpush1.msra.mxu0 0.0
      %553 = vmatprep.subr.mxu0 0.0
      %554 = vmatpush1.msra.mxu0 0.0
      %555 = vmatprep.subr.mxu0 0.0
      %556 = vmatpush1.msra.mxu0 0.0
      %557 = vmatprep.subr.mxu0 0.0
      %558 = vmatpush1.msra.mxu0 0.0
      %559 = vmatprep.subr.mxu0 0.0
      %560 = vmatpush1.msra.mxu0 0.0
      %561 = vmatprep.subr.mxu0 0.0
      %562 = vmatpush1.msra.mxu0 0.0
      %563 = vmatprep.subr.mxu0 0.0
      %564 = vmatpush1.msra.mxu0 0.0
      %565 = vmatprep.subr.mxu0 0.0
      %566 = vmatpush1.msra.mxu0 0.0
      %567 = vmatprep.subr.mxu0 0.0
      %568 = vmatpush1.msra.mxu0 0.0
      %569 = vmatprep.subr.mxu0 0.0
      %570 = vmatpush1.msra.mxu0 0.0
      %571 = vmatprep.mubr.f32.mxu0 0.0
      %572 = vmatmul.mubr.f32.gmra.mrb[0].mxu0 %v408
      %v573 = vpop.f32.mrb[0].mxu0
      %v574 = vadd.f32 0.0, %v573
      %v575 = vpop.f32.mrb[0].mxu0
      %576 = vmatprep.mubr.f32.mxu0 0.0
      %577 = vmatmul.mubr.f32.gmra.mrb[0].mxu0 %v411
      %v578 = vpop.f32.mrb[0].mxu0
      %v579 = vadd.f32 0.0, %v578
      %v580 = vpop.f32.mrb[0].mxu0
      %581 = vmatprep.mubr.f32.mxu0 0.0
      %582 = vmatmul.mubr.f32.gmra.mrb[0].mxu0 %v414
      %v583 = vpop.f32.mrb[0].mxu0
      %v584 = vadd.f32 0.0, %v583
      %v585 = vpop.f32.mrb[0].mxu0
      %586 = vmatprep.mubr.f32.mxu0 0.0
      %587 = vmatmul.mubr.f32.gmra.mrb[0].mxu0 %v417
      %v588 = vpop.f32.mrb[0].mxu0
      %v589 = vadd.f32 0.0, %v588
      %v590 = vpop.f32.mrb[0].mxu0
      %591 = vmatprep.mubr.f32.mxu0 0.0
      %592 = vmatmul.mubr.f32.gmra.mrb[0].mxu0 %v420
      %v593 = vpop.f32.mrb[0].mxu0
      %v594 = vadd.f32 0.0, %v593
      %v595 = vpop.f32.mrb[0].mxu0
      %596 = vmatprep.mubr.f32.mxu0 0.0
      %597 = vmatmul.mubr.f32.gmra.mrb[0].mxu0 %v423
      %v598 = vpop.f32.mrb[0].mxu0
      %v599 = vadd.f32 0.0, %v598
      %v600 = vpop.f32.mrb[0].mxu0
      %601 = vmatprep.mubr.f32.mxu0 0.0
      %602 = vmatmul.mubr.f32.gmra.mrb[0].mxu0 %v426
      %v603 = vpop.f32.mrb[0].mxu0
      %v604 = vadd.f32 0.0, %v603
      %v605 = vpop.f32.mrb[0].mxu0
      %606 = vmatprep.mubr.f32.mxu0 0.0
      %607 = vmatmul.mubr.f32.gmra.mrb[0].mxu0 %v429
      %v608 = vpop.f32.mrb[0].mxu0
      %v609 = vadd.f32 0.0, %v608
      %v610 = vpop.f32.mrb[0].mxu0
      %611 = vmatprep.mubr.f32.mxu0 0.0
      %612 = vmatmul.mubr.f32.gmra.mrb[0].mxu0 %v432
      %v613 = vpop.f32.mrb[0].mxu0
      %v614 = vadd.f32 0.0, %v613
      %v615 = vpop.f32.mrb[0].mxu0
      %616 = vmatprep.mubr.f32.mxu0 0.0
      %617 = vmatmul.mubr.f32.gmra.mrb[0].mxu0 %v435
      %v618 = vpop.f32.mrb[0].mxu0
      %v619 = vadd.f32 0.0, %v618
      %v620 = vpop.f32.mrb[0].mxu0
      %621 = vmatprep.mubr.f32.mxu0 0.0
      %622 = vmatmul.mubr.f32.gmra.mrb[0].mxu0 %v438
      %v623 = vpop.f32.mrb[0].mxu0
      %v624 = vadd.f32 0.0, %v623
      %v625 = vpop.f32.mrb[0].mxu0
      %626 = vmatprep.mubr.f32.mxu0 0.0
      %627 = vmatmul.mubr.f32.gmra.mrb[0].mxu0 %v441
      %v628 = vpop.f32.mrb[0].mxu0
      %v629 = vadd.f32 0.0, %v628
      %v630 = vpop.f32.mrb[0].mxu0
      %631 = vmatprep.mubr.f32.mxu0 0.0
      %632 = vmatmul.mubr.f32.gmra.mrb[0].mxu0 %v444
      %v633 = vpop.f32.mrb[0].mxu0
      %v634 = vadd.f32 0.0, %v633
      %v635 = vpop.f32.mrb[0].mxu0
      %636 = vmatprep.mubr.f32.mxu0 0.0
      %637 = vmatmul.mubr.f32.gmra.mrb[0].mxu0 %v447
      %v638 = vpop.f32.mrb[0].mxu0
      %v639 = vadd.f32 0.0, %v638
      %v640 = vpop.f32.mrb[0].mxu0
      %641 = vmatprep.mubr.f32.mxu0 0.0
      %642 = vmatmul.mubr.f32.gmra.mrb[0].mxu0 %v450
      %v643 = vpop.f32.mrb[0].mxu0
      %v644 = vadd.f32 0.0, %v643
      %v645 = vpop.f32.mrb[0].mxu0
      %646 = vmatprep.mubr.f32.mxu0 0.0
      %647 = vmatmul.mubr.f32.gmra.mrb[0].mxu0 %v453
      %v648 = vpop.f32.mrb[0].mxu0
      %v649 = vadd.f32 0.0, %v648
      %v650 = vpop.f32.mrb[0].mxu0
      %651 = vmatprep.mubr.f32.mxu0 0.0
      %652 = vmatmul.mubr.f32.gmra.mrb[0].mxu0 %v456
      %v653 = vpop.f32.mrb[0].mxu0
      %v654 = vadd.f32 0.0, %v653
      %v655 = vpop.f32.mrb[0].mxu0
      %656 = vmatprep.mubr.f32.mxu0 0.0
      %657 = vmatmul.mubr.f32.gmra.mrb[0].mxu0 %v459
      %v658 = vpop.f32.mrb[0].mxu0
      %v659 = vadd.f32 0.0, %v658
      %v660 = vpop.f32.mrb[0].mxu0
      %661 = vmatprep.mubr.f32.mxu0 0.0
      %662 = vmatmul.mubr.f32.gmra.mrb[0].mxu0 %v462
      %v663 = vpop.f32.mrb[0].mxu0
      %v664 = vadd.f32 0.0, %v663
      %v665 = vpop.f32.mrb[0].mxu0
      %666 = vmatprep.mubr.f32.mxu0 0.0
      %667 = vmatmul.mubr.f32.gmra.mrb[0].mxu0 %v465
      %v668 = vpop.f32.mrb[0].mxu0
      %v669 = vadd.f32 0.0, %v668
      %v670 = vpop.f32.mrb[0].mxu0
      %671 = vmatprep.mubr.f32.mxu0 0.0
      %672 = vmatmul.mubr.f32.gmra.mrb[0].mxu0 %v468
      %v673 = vpop.f32.mrb[0].mxu0
      %v674 = vadd.f32 0.0, %v673
      %v675 = vpop.f32.mrb[0].mxu0
      %676 = vmatprep.mubr.f32.mxu0 0.0
      %677 = vmatmul.mubr.f32.gmra.mrb[0].mxu0 %v471
      %v678 = vpop.f32.mrb[0].mxu0
      %v679 = vadd.f32 0.0, %v678
      %v680 = vpop.f32.mrb[0].mxu0
      %681 = vmatprep.mubr.f32.mxu0 0.0
      %682 = vmatmul.mubr.f32.gmra.mrb[0].mxu0 %v474
      %v683 = vpop.f32.mrb[0].mxu0
      %v684 = vadd.f32 0.0, %v683
      %v685 = vpop.f32.mrb[0].mxu0
      %686 = vmatprep.mubr.f32.mxu0 0.0
      %687 = vmatmul.mubr.f32.gmra.mrb[0].mxu0 %v477
      %v688 = vpop.f32.mrb[0].mxu0
      %v689 = vadd.f32 0.0, %v688
      %v690 = vpop.f32.mrb[0].mxu0
      %691 = vmatprep.mubr.f32.mxu0 0.0
      %692 = vmatmul.mubr.f32.gmra.mrb[0].mxu0 %v480
      %v693 = vpop.f32.mrb[0].mxu0
      %v694 = vadd.f32 0.0, %v693
      %v695 = vpop.f32.mrb[0].mxu0
      %696 = vmatprep.mubr.f32.mxu0 0.0
      %697 = vmatmul.mubr.f32.gmra.mrb[0].mxu0 %v483
      %v698 = vpop.f32.mrb[0].mxu0
      %v699 = vadd.f32 0.0, %v698
      %v700 = vpop.f32.mrb[0].mxu0
      %701 = vmatprep.mubr.f32.mxu0 0.0
      %702 = vmatmul.mubr.f32.gmra.mrb[0].mxu0 %v486
      %v703 = vpop.f32.mrb[0].mxu0
      %v704 = vadd.f32 0.0, %v703
      %v705 = vpop.f32.mrb[0].mxu0
      %706 = vmatprep.mubr.f32.mxu0 0.0
      %707 = vmatmul.mubr.f32.gmra.mrb[0].mxu0 %v489
      %v708 = vpop.f32.mrb[0].mxu0
      %v709 = vadd.f32 0.0, %v708
      %v710 = vpop.f32.mrb[0].mxu0
      %711 = vmatprep.mubr.f32.mxu0 0.0
      %712 = vmatmul.mubr.f32.gmra.mrb[0].mxu0 %v492
      %v713 = vpop.f32.mrb[0].mxu0
      %v714 = vadd.f32 0.0, %v713
      %v715 = vpop.f32.mrb[0].mxu0
      %716 = vmatprep.mubr.f32.mxu0 0.0
      %717 = vmatmul.mubr.f32.gmra.mrb[0].mxu0 %v495
      %v718 = vpop.f32.mrb[0].mxu0
      %v719 = vadd.f32 0.0, %v718
      %v720 = vpop.f32.mrb[0].mxu0
      %721 = vmatprep.mubr.f32.mxu0 0.0
      %722 = vmatmul.mubr.f32.gmra.mrb[0].mxu0 %v498
      %v723 = vpop.f32.mrb[0].mxu0
      %v724 = vadd.f32 0.0, %v723
      %v725 = vpop.f32.mrb[0].mxu0
      %726 = vmatprep.mubr.f32.mxu0 0.0
      %727 = vmatmul.mubr.f32.gmra.mrb[0].mxu0 %v501
      %v728 = vpop.f32.mrb[0].mxu0
      %v729 = vadd.f32 0.0, %v728
      %v730 = vpop.f32.mrb[0].mxu0
      %731 = vdwg.mxu0
      %v732 = vadd.f32 %v337, %v574
      %v733 = vadd.f32 %v338, %v579
      %v734 = vadd.f32 %v339, %v584
      %v735 = vadd.f32 %v340, %v589
      %v736 = vadd.f32 %v341, %v594
      %v737 = vadd.f32 %v342, %v599
      %v738 = vadd.f32 %v343, %v604
      %v739 = vadd.f32 %v344, %v609
      %v740 = vadd.f32 %v345, %v614
      %v741 = vadd.f32 %v346, %v619
      %v742 = vadd.f32 %v347, %v624
      %v743 = vadd.f32 %v348, %v629
      %v744 = vadd.f32 %v349, %v634
      %v745 = vadd.f32 %v350, %v639
      %v746 = vadd.f32 %v351, %v644
      %v747 = vadd.f32 %v352, %v649
      %v748 = vadd.f32 %v353, %v654
      %v749 = vadd.f32 %v354, %v659
      %v750 = vadd.f32 %v355, %v664
      %v751 = vadd.f32 %v356, %v669
      %v752 = vadd.f32 %v357, %v674
      %v753 = vadd.f32 %v358, %v679
      %v754 = vadd.f32 %v359, %v684
      %v755 = vadd.f32 %v360, %v689
      %v756 = vadd.f32 %v361, %v694
      %v757 = vadd.f32 %v362, %v699
      %v758 = vadd.f32 %v363, %v704
      %v759 = vadd.f32 %v364, %v709
      %v760 = vadd.f32 %v365, %v714
      %v761 = vadd.f32 %v366, %v719
      %v762 = vadd.f32 %v367, %v724
      %v763 = vadd.f32 %v368, %v729
      %vm764 = vcmask 64512
      %765 = vst.msk [vmem:[#allocation2] sm:$0xff] %vm764, %v732
      %766 = vst.msk [vmem:[#allocation2 + $0x8] sm:$0xff] %vm764, %v733
      %767 = vst.msk [vmem:[#allocation2 + $0x10] sm:$0xff] %vm764, %v734
      %768 = vst.msk [vmem:[#allocation2 + $0x18] sm:$0xff] %vm764, %v735
      %769 = vst.msk [vmem:[#allocation2 + $0x20] sm:$0xff] %vm764, %v736
      %770 = vst.msk [vmem:[#allocation2 + $0x28] sm:$0xff] %vm764, %v737
      %771 = vst.msk [vmem:[#allocation2 + $0x30] sm:$0xff] %vm764, %v738
      %772 = vst.msk [vmem:[#allocation2 + $0x38] sm:$0xff] %vm764, %v739
      %773 = vst.msk [vmem:[#allocation2 + $0x40] sm:$0xff] %vm764, %v740
      %774 = vst.msk [vmem:[#allocation2 + $0x48] sm:$0xff] %vm764, %v741
      %775 = vst.msk [vmem:[#allocation2 + $0x50] sm:$0xff] %vm764, %v742
      %776 = vst.msk [vmem:[#allocation2 + $0x58] sm:$0xff] %vm764, %v743
      %777 = vst.msk [vmem:[#allocation2 + $0x60] sm:$0xff] %vm764, %v744
      %778 = vst.msk [vmem:[#allocation2 + $0x68] sm:$0xff] %vm764, %v745
      %779 = vst.msk [vmem:[#allocation2 + $0x70] sm:$0xff] %vm764, %v746
      %780 = vst.msk [vmem:[#allocation2 + $0x78] sm:$0xff] %vm764, %v747
      %781 = vst.msk [vmem:[#allocation2 + $0x80] sm:$0xff] %vm764, %v748
      %782 = vst.msk [vmem:[#allocation2 + $0x88] sm:$0xff] %vm764, %v749
      %783 = vst.msk [vmem:[#allocation2 + $0x90] sm:$0xff] %vm764, %v750
      %784 = vst.msk [vmem:[#allocation2 + $0x98] sm:$0xff] %vm764, %v751
      %785 = vst.msk [vmem:[#allocation2 + $0xa0] sm:$0xff] %vm764, %v752
      %786 = vst.msk [vmem:[#allocation2 + $0xa8] sm:$0xff] %vm764, %v753
      %787 = vst.msk [vmem:[#allocation2 + $0xb0] sm:$0xff] %vm764, %v754
      %788 = vst.msk [vmem:[#allocation2 + $0xb8] sm:$0xff] %vm764, %v755
      %789 = vst.msk [vmem:[#allocation2 + $0xc0] sm:$0xff] %vm764, %v756
      %790 = vst.msk [vmem:[#allocation2 + $0xc8] sm:$0xff] %vm764, %v757
      %791 = vst.msk [vmem:[#allocation2 + $0xd0] sm:$0xff] %vm764, %v758
      %792 = vst.msk [vmem:[#allocation2 + $0xd8] sm:$0xff] %vm764, %v759
      %793 = vst.msk [vmem:[#allocation2 + $0xe0] sm:$0xff] %vm764, %v760
      %794 = vst.msk [vmem:[#allocation2 + $0xe8] sm:$0xff] %vm764, %v761
      %795 = vst.msk [vmem:[#allocation2 + $0xf0] sm:$0xff] %vm764, %v762
      %796 = vst.msk [vmem:[#allocation2 + $0xf8] sm:$0xff] %vm764, %v763
      // Predicated region
      $region41: #{conv_bn_silu.1} parent=35 // pred_check
        %p797 = pneg %p300
      $region42: #{conv_bn_silu.1} parent=35 // pred_check_branch
        %799 = sbr.rel (%p797) target = $region44
      $region43: #{conv_bn_silu.1} parent=35 // pred_region
        %v800 = vld [vmem:[#allocation2] sm:$0xff]
        %v801 = vld [vmem:[#allocation2 + $0x8] sm:$0xff]
        %v802 = vld [vmem:[#allocation2 + $0x10] sm:$0xff]
        %v803 = vld [vmem:[#allocation2 + $0x18] sm:$0xff]
        %v804 = vld [vmem:[#allocation2 + $0x20] sm:$0xff]
        %v805 = vld [vmem:[#allocation2 + $0x28] sm:$0xff]
        %v806 = vld [vmem:[#allocation2 + $0x30] sm:$0xff]
        %v807 = vld [vmem:[#allocation2 + $0x38] sm:$0xff]
        %v808 = vld [vmem:[#allocation2 + $0x40] sm:$0xff]
        %v809 = vld [vmem:[#allocation2 + $0x48] sm:$0xff]
        %v810 = vld [vmem:[#allocation2 + $0x50] sm:$0xff]
        %v811 = vld [vmem:[#allocation2 + $0x58] sm:$0xff]
        %v812 = vld [vmem:[#allocation2 + $0x60] sm:$0xff]
        %v813 = vld [vmem:[#allocation2 + $0x68] sm:$0xff]
        %v814 = vld [vmem:[#allocation2 + $0x70] sm:$0xff]
        %v815 = vld [vmem:[#allocation2 + $0x78] sm:$0xff]
        %v816 = vld [vmem:[#allocation2 + $0x80] sm:$0xff]
        %v817 = vld [vmem:[#allocation2 + $0x88] sm:$0xff]
        %v818 = vld [vmem:[#allocation2 + $0x90] sm:$0xff]
        %v819 = vld [vmem:[#allocation2 + $0x98] sm:$0xff]
        %v820 = vld [vmem:[#allocation2 + $0xa0] sm:$0xff]
        %v821 = vld [vmem:[#allocation2 + $0xa8] sm:$0xff]
        %v822 = vld [vmem:[#allocation2 + $0xb0] sm:$0xff]
        %v823 = vld [vmem:[#allocation2 + $0xb8] sm:$0xff]
        %v824 = vld [vmem:[#allocation2 + $0xc0] sm:$0xff]
        %v825 = vld [vmem:[#allocation2 + $0xc8] sm:$0xff]
        %v826 = vld [vmem:[#allocation2 + $0xd0] sm:$0xff]
        %v827 = vld [vmem:[#allocation2 + $0xd8] sm:$0xff]
        %v828 = vld [vmem:[#allocation2 + $0xe0] sm:$0xff]
        %v829 = vld [vmem:[#allocation2 + $0xe8] sm:$0xff]
        %v830 = vld [vmem:[#allocation2 + $0xf0] sm:$0xff]
        %v831 = vld [vmem:[#allocation2 + $0xf8] sm:$0xff]
        %v832 = vld [vmem:[%s287] sm:$0x1]
        %v834 = vlaneseq
        %v835 = vshrl.u32 %v834, 7
        %v836 = vsub.s32 0, %v835
        %v837 = vrot.slane %v832, %v836
        %v839 = vmul.f32 %v800, %v837
        %v840 = vmul.f32 %v801, %v837
        %v841 = vmul.f32 %v802, %v837
        %v842 = vmul.f32 %v803, %v837
        %v843 = vmul.f32 %v804, %v837
        %v844 = vmul.f32 %v805, %v837
        %v845 = vmul.f32 %v806, %v837
        %v846 = vmul.f32 %v807, %v837
        %v847 = vmul.f32 %v808, %v837
        %v848 = vmul.f32 %v809, %v837
        %v849 = vmul.f32 %v810, %v837
        %v850 = vmul.f32 %v811, %v837
        %v851 = vmul.f32 %v812, %v837
        %v852 = vmul.f32 %v813, %v837
        %v853 = vmul.f32 %v814, %v837
        %v854 = vmul.f32 %v815, %v837
        %v855 = vmul.f32 %v816, %v837
        %v856 = vmul.f32 %v817, %v837
        %v857 = vmul.f32 %v818, %v837
        %v858 = vmul.f32 %v819, %v837
        %v859 = vmul.f32 %v820, %v837
        %v860 = vmul.f32 %v821, %v837
        %v861 = vmul.f32 %v822, %v837
        %v862 = vmul.f32 %v823, %v837
        %v863 = vmul.f32 %v824, %v837
        %v864 = vmul.f32 %v825, %v837
        %v865 = vmul.f32 %v826, %v837
        %v866 = vmul.f32 %v827, %v837
        %v867 = vmul.f32 %v828, %v837
        %v868 = vmul.f32 %v829, %v837
        %v869 = vmul.f32 %v830, %v837
        %v870 = vmul.f32 %v831, %v837
        %v871 = vld [vmem:[%s290] sm:$0x1]
        %v873 = vlaneseq
        %v874 = vshrl.u32 %v873, 7
        %v875 = vsub.s32 0, %v874
        %v876 = vrot.slane %v871, %v875
        %v878 = vadd.f32 %v839, %v876
        %v879 = vadd.f32 %v840, %v876
        %v880 = vadd.f32 %v841, %v876
        %v881 = vadd.f32 %v842, %v876
        %v882 = vadd.f32 %v843, %v876
        %v883 = vadd.f32 %v844, %v876
        %v884 = vadd.f32 %v845, %v876
        %v885 = vadd.f32 %v846, %v876
        %v886 = vadd.f32 %v847, %v876
        %v887 = vadd.f32 %v848, %v876
        %v888 = vadd.f32 %v849, %v876
        %v889 = vadd.f32 %v850, %v876
        %v890 = vadd.f32 %v851, %v876
        %v891 = vadd.f32 %v852, %v876
        %v892 = vadd.f32 %v853, %v876
        %v893 = vadd.f32 %v854, %v876
        %v894 = vadd.f32 %v855, %v876
        %v895 = vadd.f32 %v856, %v876
        %v896 = vadd.f32 %v857, %v876
        %v897 = vadd.f32 %v858, %v876
        %v898 = vadd.f32 %v859, %v876
        %v899 = vadd.f32 %v860, %v876
        %v900 = vadd.f32 %v861, %v876
        %v901 = vadd.f32 %v862, %v876
        %v902 = vadd.f32 %v863, %v876
        %v903 = vadd.f32 %v864, %v876
        %v904 = vadd.f32 %v865, %v876
        %v905 = vadd.f32 %v866, %v876
        %v906 = vadd.f32 %v867, %v876
        %v907 = vadd.f32 %v868, %v876
        %v908 = vadd.f32 %v869, %v876
        %v909 = vadd.f32 %v870, %v876
        %v910 = vxor.u32 %v878, 2147483648
        %v911 = vxor.u32 %v879, 2147483648
        %v912 = vxor.u32 %v880, 2147483648
        %v913 = vxor.u32 %v881, 2147483648
        %v914 = vxor.u32 %v882, 2147483648
        %v915 = vxor.u32 %v883, 2147483648
        %v916 = vxor.u32 %v884, 2147483648
        %v917 = vxor.u32 %v885, 2147483648
        %v918 = vxor.u32 %v886, 2147483648
        %v919 = vxor.u32 %v887, 2147483648
        %v920 = vxor.u32 %v888, 2147483648
        %v921 = vxor.u32 %v889, 2147483648
        %v922 = vxor.u32 %v890, 2147483648
        %v923 = vxor.u32 %v891, 2147483648
        %v924 = vxor.u32 %v892, 2147483648
        %v925 = vxor.u32 %v893, 2147483648
        %v926 = vxor.u32 %v894, 2147483648
        %v927 = vxor.u32 %v895, 2147483648
        %v928 = vxor.u32 %v896, 2147483648
        %v929 = vxor.u32 %v897, 2147483648
        %v930 = vxor.u32 %v898, 2147483648
        %v931 = vxor.u32 %v899, 2147483648
        %v932 = vxor.u32 %v900, 2147483648
        %v933 = vxor.u32 %v901, 2147483648
        %v934 = vxor.u32 %v902, 2147483648
        %v935 = vxor.u32 %v903, 2147483648
        %v936 = vxor.u32 %v904, 2147483648
        %v937 = vxor.u32 %v905, 2147483648
        %v938 = vxor.u32 %v906, 2147483648
        %v939 = vxor.u32 %v907, 2147483648
        %v940 = vxor.u32 %v908, 2147483648
        %v941 = vxor.u32 %v909, 2147483648
        %v942 = vmul.f32 %v910, 1.442695
        %v943 = vpow.pop %v942
        %v944 = vmul.f32 %v911, 1.442695
        %v945 = vpow.pop %v944
        %v946 = vmul.f32 %v912, 1.442695
        %v947 = vpow.pop %v946
        %v948 = vmul.f32 %v913, 1.442695
        %v949 = vpow.pop %v948
        %v950 = vmul.f32 %v914, 1.442695
        %v951 = vpow.pop %v950
        %v952 = vmul.f32 %v915, 1.442695
        %v953 = vpow.pop %v952
        %v954 = vmul.f32 %v916, 1.442695
        %v955 = vpow.pop %v954
        %v956 = vmul.f32 %v917, 1.442695
        %v957 = vpow.pop %v956
        %v958 = vmul.f32 %v918, 1.442695
        %v959 = vpow.pop %v958
        %v960 = vmul.f32 %v919, 1.442695
        %v961 = vpow.pop %v960
        %v962 = vmul.f32 %v920, 1.442695
        %v963 = vpow.pop %v962
        %v964 = vmul.f32 %v921, 1.442695
        %v965 = vpow.pop %v964
        %v966 = vmul.f32 %v922, 1.442695
        %v967 = vpow.pop %v966
        %v968 = vmul.f32 %v923, 1.442695
        %v969 = vpow.pop %v968
        %v970 = vmul.f32 %v924, 1.442695
        %v971 = vpow.pop %v970
        %v972 = vmul.f32 %v925, 1.442695
        %v973 = vpow.pop %v972
        %v974 = vmul.f32 %v926, 1.442695
        %v975 = vpow.pop %v974
        %v976 = vmul.f32 %v927, 1.442695
        %v977 = vpow.pop %v976
        %v978 = vmul.f32 %v928, 1.442695
        %v979 = vpow.pop %v978
        %v980 = vmul.f32 %v929, 1.442695
        %v981 = vpow.pop %v980
        %v982 = vmul.f32 %v930, 1.442695
        %v983 = vpow.pop %v982
        %v984 = vmul.f32 %v931, 1.442695
        %v985 = vpow.pop %v984
        %v986 = vmul.f32 %v932, 1.442695
        %v987 = vpow.pop %v986
        %v988 = vmul.f32 %v933, 1.442695
        %v989 = vpow.pop %v988
        %v990 = vmul.f32 %v934, 1.442695
        %v991 = vpow.pop %v990
        %v992 = vmul.f32 %v935, 1.442695
        %v993 = vpow.pop %v992
        %v994 = vmul.f32 %v936, 1.442695
        %v995 = vpow.pop %v994
        %v996 = vmul.f32 %v937, 1.442695
        %v997 = vpow.pop %v996
        %v998 = vmul.f32 %v938, 1.442695
        %v999 = vpow.pop %v998
        %v1000 = vmul.f32 %v939, 1.442695
        %v1001 = vpow.pop %v1000
        %v1002 = vmul.f32 %v940, 1.442695
        %v1003 = vpow.pop %v1002
        %v1004 = vmul.f32 %v941, 1.442695
        %v1005 = vpow.pop %v1004
        %v1006 = vadd.f32 %v943, 1.0
        %v1007 = vadd.f32 %v945, 1.0
        %v1008 = vadd.f32 %v947, 1.0
        %v1009 = vadd.f32 %v949, 1.0
        %v1010 = vadd.f32 %v951, 1.0
        %v1011 = vadd.f32 %v953, 1.0
        %v1012 = vadd.f32 %v955, 1.0
        %v1013 = vadd.f32 %v957, 1.0
        %v1014 = vadd.f32 %v959, 1.0
        %v1015 = vadd.f32 %v961, 1.0
        %v1016 = vadd.f32 %v963, 1.0
        %v1017 = vadd.f32 %v965, 1.0
        %v1018 = vadd.f32 %v967, 1.0
        %v1019 = vadd.f32 %v969, 1.0
        %v1020 = vadd.f32 %v971, 1.0
        %v1021 = vadd.f32 %v973, 1.0
        %v1022 = vadd.f32 %v975, 1.0
        %v1023 = vadd.f32 %v977, 1.0
        %v1024 = vadd.f32 %v979, 1.0
        %v1025 = vadd.f32 %v981, 1.0
        %v1026 = vadd.f32 %v983, 1.0
        %v1027 = vadd.f32 %v985, 1.0
        %v1028 = vadd.f32 %v987, 1.0
        %v1029 = vadd.f32 %v989, 1.0
        %v1030 = vadd.f32 %v991, 1.0
        %v1031 = vadd.f32 %v993, 1.0
        %v1032 = vadd.f32 %v995, 1.0
        %v1033 = vadd.f32 %v997, 1.0
        %v1034 = vadd.f32 %v999, 1.0
        %v1035 = vadd.f32 %v1001, 1.0
        %v1036 = vadd.f32 %v1003, 1.0
        %v1037 = vadd.f32 %v1005, 1.0
        %v1038 = vrcp.pop %v1006
        %v1039 = vmul.f32 1.0, %v1038
        %v1040 = vrcp.pop %v1007
        %v1041 = vmul.f32 1.0, %v1040
        %v1042 = vrcp.pop %v1008
        %v1043 = vmul.f32 1.0, %v1042
        %v1044 = vrcp.pop %v1009
        %v1045 = vmul.f32 1.0, %v1044
        %v1046 = vrcp.pop %v1010
        %v1047 = vmul.f32 1.0, %v1046
        %v1048 = vrcp.pop %v1011
        %v1049 = vmul.f32 1.0, %v1048
        %v1050 = vrcp.pop %v1012
        %v1051 = vmul.f32 1.0, %v1050
        %v1052 = vrcp.pop %v1013
        %v1053 = vmul.f32 1.0, %v1052
        %v1054 = vrcp.pop %v1014
        %v1055 = vmul.f32 1.0, %v1054
        %v1056 = vrcp.pop %v1015
        %v1057 = vmul.f32 1.0, %v1056
        %v1058 = vrcp.pop %v1016
        %v1059 = vmul.f32 1.0, %v1058
        %v1060 = vrcp.pop %v1017
        %v1061 = vmul.f32 1.0, %v1060
        %v1062 = vrcp.pop %v1018
        %v1063 = vmul.f32 1.0, %v1062
        %v1064 = vrcp.pop %v1019
        %v1065 = vmul.f32 1.0, %v1064
        %v1066 = vrcp.pop %v1020
        %v1067 = vmul.f32 1.0, %v1066
        %v1068 = vrcp.pop %v1021
        %v1069 = vmul.f32 1.0, %v1068
        %v1070 = vrcp.pop %v1022
        %v1071 = vmul.f32 1.0, %v1070
        %v1072 = vrcp.pop %v1023
        %v1073 = vmul.f32 1.0, %v1072
        %v1074 = vrcp.pop %v1024
        %v1075 = vmul.f32 1.0, %v1074
        %v1076 = vrcp.pop %v1025
        %v1077 = vmul.f32 1.0, %v1076
        %v1078 = vrcp.pop %v1026
        %v1079 = vmul.f32 1.0, %v1078
        %v1080 = vrcp.pop %v1027
        %v1081 = vmul.f32 1.0, %v1080
        %v1082 = vrcp.pop %v1028
        %v1083 = vmul.f32 1.0, %v1082
        %v1084 = vrcp.pop %v1029
        %v1085 = vmul.f32 1.0, %v1084
        %v1086 = vrcp.pop %v1030
        %v1087 = vmul.f32 1.0, %v1086
        %v1088 = vrcp.pop %v1031
        %v1089 = vmul.f32 1.0, %v1088
        %v1090 = vrcp.pop %v1032
        %v1091 = vmul.f32 1.0, %v1090
        %v1092 = vrcp.pop %v1033
        %v1093 = vmul.f32 1.0, %v1092
        %v1094 = vrcp.pop %v1034
        %v1095 = vmul.f32 1.0, %v1094
        %v1096 = vrcp.pop %v1035
        %v1097 = vmul.f32 1.0, %v1096
        %v1098 = vrcp.pop %v1036
        %v1099 = vmul.f32 1.0, %v1098
        %v1100 = vrcp.pop %v1037
        %v1101 = vmul.f32 1.0, %v1100
        %v1102 = vmul.f32 %v878, %v1039
        %v1103 = vmul.f32 %v879, %v1041
        %v1104 = vmul.f32 %v880, %v1043
        %v1105 = vmul.f32 %v881, %v1045
        %v1106 = vmul.f32 %v882, %v1047
        %v1107 = vmul.f32 %v883, %v1049
        %v1108 = vmul.f32 %v884, %v1051
        %v1109 = vmul.f32 %v885, %v1053
        %v1110 = vmul.f32 %v886, %v1055
        %v1111 = vmul.f32 %v887, %v1057
        %v1112 = vmul.f32 %v888, %v1059
        %v1113 = vmul.f32 %v889, %v1061
        %v1114 = vmul.f32 %v890, %v1063
        %v1115 = vmul.f32 %v891, %v1065
        %v1116 = vmul.f32 %v892, %v1067
        %v1117 = vmul.f32 %v893, %v1069
        %v1118 = vmul.f32 %v894, %v1071
        %v1119 = vmul.f32 %v895, %v1073
        %v1120 = vmul.f32 %v896, %v1075
        %v1121 = vmul.f32 %v897, %v1077
        %v1122 = vmul.f32 %v898, %v1079
        %v1123 = vmul.f32 %v899, %v1081
        %v1124 = vmul.f32 %v900, %v1083
        %v1125 = vmul.f32 %v901, %v1085
        %v1126 = vmul.f32 %v902, %v1087
        %v1127 = vmul.f32 %v903, %v1089
        %v1128 = vmul.f32 %v904, %v1091
        %v1129 = vmul.f32 %v905, %v1093
        %v1130 = vmul.f32 %v906, %v1095
        %v1131 = vmul.f32 %v907, %v1097
        %v1132 = vmul.f32 %v908, %v1099
        %v1133 = vmul.f32 %v909, %v1101
        %1134 = vst.msk [vmem:[%s298] sm:$0xff] %vm764, %v1102
        %1135 = vst.msk [vmem:[%s298 + $0x8] sm:$0xff] %vm764, %v1103
        %1136 = vst.msk [vmem:[%s298 + $0x10] sm:$0xff] %vm764, %v1104
        %1137 = vst.msk [vmem:[%s298 + $0x18] sm:$0xff] %vm764, %v1105
        %1138 = vst.msk [vmem:[%s298 + $0x20] sm:$0xff] %vm764, %v1106
        %1139 = vst.msk [vmem:[%s298 + $0x28] sm:$0xff] %vm764, %v1107
        %1140 = vst.msk [vmem:[%s298 + $0x30] sm:$0xff] %vm764, %v1108
        %1141 = vst.msk [vmem:[%s298 + $0x38] sm:$0xff] %vm764, %v1109
        %1142 = vst.msk [vmem:[%s298 + $0x40] sm:$0xff] %vm764, %v1110
        %1143 = vst.msk [vmem:[%s298 + $0x48] sm:$0xff] %vm764, %v1111
        %1144 = vst.msk [vmem:[%s298 + $0x50] sm:$0xff] %vm764, %v1112
        %1145 = vst.msk [vmem:[%s298 + $0x58] sm:$0xff] %vm764, %v1113
        %1146 = vst.msk [vmem:[%s298 + $0x60] sm:$0xff] %vm764, %v1114
        %1147 = vst.msk [vmem:[%s298 + $0x68] sm:$0xff] %vm764, %v1115
        %1148 = vst.msk [vmem:[%s298 + $0x70] sm:$0xff] %vm764, %v1116
        %1149 = vst.msk [vmem:[%s298 + $0x78] sm:$0xff] %vm764, %v1117
        %1150 = vst.msk [vmem:[%s298 + $0x80] sm:$0xff] %vm764, %v1118
        %1151 = vst.msk [vmem:[%s298 + $0x88] sm:$0xff] %vm764, %v1119
        %1152 = vst.msk [vmem:[%s298 + $0x90] sm:$0xff] %vm764, %v1120
        %1153 = vst.msk [vmem:[%s298 + $0x98] sm:$0xff] %vm764, %v1121
        %1154 = vst.msk [vmem:[%s298 + $0xa0] sm:$0xff] %vm764, %v1122
        %1155 = vst.msk [vmem:[%s298 + $0xa8] sm:$0xff] %vm764, %v1123
        %1156 = vst.msk [vmem:[%s298 + $0xb0] sm:$0xff] %vm764, %v1124
        %1157 = vst.msk [vmem:[%s298 + $0xb8] sm:$0xff] %vm764, %v1125
        %1158 = vst.msk [vmem:[%s298 + $0xc0] sm:$0xff] %vm764, %v1126
        %1159 = vst.msk [vmem:[%s298 + $0xc8] sm:$0xff] %vm764, %v1127
        %1160 = vst.msk [vmem:[%s298 + $0xd0] sm:$0xff] %vm764, %v1128
        %1161 = vst.msk [vmem:[%s298 + $0xd8] sm:$0xff] %vm764, %v1129
        %1162 = vst.msk [vmem:[%s298 + $0xe0] sm:$0xff] %vm764, %v1130
        %1163 = vst.msk [vmem:[%s298 + $0xe8] sm:$0xff] %vm764, %v1131
        %1164 = vst.msk [vmem:[%s298 + $0xf0] sm:$0xff] %vm764, %v1132
        %1165 = vst.msk [vmem:[%s298 + $0xf8] sm:$0xff] %vm764, %v1133
      $region44: #{conv_bn_silu.1} parent=35 // pred_fallthru
        _
      %s1166 = smul.u32 32, %s20
      %p1167 = scmp.lt.s32.totalorder %s1166, 63
      %s1168 = scalar_select %p1167, %s1166, 63
      %p1169 = scmp.lt.s32.totalorder %s21, 0
      %s1170 = scalar_select %p1169, %s21, 0
      %s1171 = sadd.s32 %s1170, %s1168
      %s1172 = smul.addr %s1171, 8
      %s1173 = scalar_lea.vmem %s4, %s1172
      // Predicated region
      $region45: #{conv_bn_silu.1} parent=35 // pred_check
        %p1174 = pneg %p162
      $region46: #{conv_bn_silu.1} parent=35 // pred_check_branch
        %1176 = sbr.rel (%p1174) target = $region48
      $region47: #{conv_bn_silu.1} parent=35 // pred_region
        %s1177 = smul.u32 32, %s20
      $region48: #{conv_bn_silu.1} parent=35 // pred_fallthru
        _
    $region36: #{conv_bn_silu.1} parent=5 // pred_fallthru
      _
    %p1178 = scmp.le.s32.totalorder 2, %s10
    // Predicated region
    $region49: #{conv_bn_silu.1} parent=5 // pred_check
      %p1179 = pneg %p1178
    $region50: #{conv_bn_silu.1} parent=5 // pred_check_branch
      %1181 = sbr.rel (%p1179) target = $region52
    $region51: #{conv_bn_silu.1} parent=5 // pred_region
      %s1182 = ssub.s32 %s10, 2
      // Predicated region
      $region53: #{conv_bn_silu.1} parent=51 // pred_check
        %p1183 = pneg %p168
      $region54: #{conv_bn_silu.1} parent=51 // pred_check_branch
        %1185 = sbr.rel (%p1183) target = $region56
      $region55: #{conv_bn_silu.1} parent=51 // pred_region
        %s1186 = smul.u32 32, %s23
        %p1187 = scmp.lt.s32.totalorder %s1186, 63
        %s1188 = scalar_select %p1187, %s1186, 63
        %p1189 = scmp.lt.s32.totalorder %s24, 0
        %s1190 = scalar_select %p1189, %s24, 0
        %s1191 = sadd.s32 %s1190, %s1188
        %s1192 = smul.addr %s1191, 8
        %s1193 = scalar_lea.vmem %s4, %s1192
      $region56: #{conv_bn_silu.1} parent=51 // pred_fallthru
        _
    $region52: #{conv_bn_silu.1} parent=5 // pred_fallthru
      _
  $region6: #{conv_bn_silu.1} parent=0 // loop_footer
    %s14 = sadd.s32 1, %s10
  $region7: #{conv_bn_silu.1} parent=0 // loop_footer_branch
    %9 = sbr.rel target = $region3
  $region8: #{conv_bn_silu.1} parent=0 // loop_exit
    _

</llo_original>
